<compile_context>
chip_gen: v5e
topology: v5e:2x2
jax: 0.10.0
libtpu: 0.0.40
codegen_flags: <defaults>
</compile_context>

<pallas_src>
import functools
import math

import jax
import jax.numpy as jnp
from jax import lax
from jax.experimental import pallas as pl
from jax.experimental.pallas import tpu as pltpu

_LANES = 128
_SUBLANES = 8
_CHUNK_ROWS = 512                          # in-kernel strip-mine granularity
_MAX_BLOCK_BYTES = 4 * 1024 * 1024         # per-stream block size (roofline knee)
_WEIGHT_RESIDENT_MAX_BYTES = 4 * 1024 * 1024
_VMEM_LIMIT_BYTES = 32 * 1024 * 1024       # fits v7x (64 MiB phys) and raises v5e's 16 MiB default


def _round_up(x, m):
    return ((x + m - 1) // m) * m


def _cdiv(a, b):
    return (a + b - 1) // b


def _hint(idx, m):
    # pl.multiple_of only for traced indices; plain Python ints pass through.
    return idx if isinstance(idx, int) else pl.multiple_of(idx, m)


def _wbce_kernel(pred_ref, tgt_ref, w_ref, out_ref, *,
                 rows_valid, tile_rows, chunk_rows, tiles_per_split,
                 weight_resident, needs_mask):
    """Grid = (B, splits, tiles_per_split); semantics (parallel, parallel, arbitrary).

    pred_ref/tgt_ref: (1, tile_rows, 128) blocks of the streamed inputs.
    w_ref: resident (covered_rows, 128) weight, or a streamed (tile_rows, 128) block.
    out_ref: (1, 1, 8, 128) per-(batch, split) partial-sum slab, resident over
    the innermost (reduction) grid axis.
    """
    t = pl.program_id(2)

    @pl.when(t == 0)
    def _():
        out_ref[...] = jnp.zeros_like(out_ref)

    s = pl.program_id(1)
    blk = s * tiles_per_split + t          # logical row-block index (may exceed real blocks)
    row0 = blk * tile_rows                 # first sample-space row of this block

    def chunk_contrib(off, csize):
        # `off` is the row offset within the block (static or traced, multiple
        # of 8); `csize` is a static row count (multiple of the sublane pack).
        off_h = _hint(off, _SUBLANES)
        x = pred_ref[0, pl.ds(off_h, csize), :].astype(jnp.float32)
        y = tgt_ref[0, pl.ds(off_h, csize), :].astype(jnp.float32)
        if weight_resident:
            w = w_ref[pl.ds(_hint(row0 + off, _SUBLANES), csize), :].astype(jnp.float32)
        else:
            w = w_ref[pl.ds(off_h, csize), :].astype(jnp.float32)

        # Numerically stable BCE-with-logits, PyTorch's formulation:
        #   max(x, 0) - x*y + log1p(exp(-|x|)); exp/log1p go to the EUP slot.
        per = w * (jnp.maximum(x, 0.0) - x * y + jnp.log1p(jnp.exp(-jnp.abs(x))))

        if needs_mask:
            # Rows at/after `rows_valid` are ragged-block garbage (or phantom
            # split duplicates).  Select them away AFTER the math: jnp.where
            # only selects, so NaN/Inf in the dropped branch cannot leak.
            r = lax.broadcasted_iota(jnp.int32, (csize, _LANES), 0)
            per = jnp.where(r < (rows_valid - (row0 + off)), per, 0.0)

        # VPU-only fold down to a single (8, 128) vreg (no cross-lane XLU work;
        # the one tiny cross-lane reduce happens in the wrapper).
        return jnp.sum(per.reshape(-1, _SUBLANES, _LANES), axis=0)

    acc = jnp.zeros((_SUBLANES, _LANES), jnp.float32)
    full_chunks = tile_rows // chunk_rows
    rem = tile_rows % chunk_rows
    if full_chunks == 1:
        acc = acc + chunk_contrib(0, chunk_rows)
    elif full_chunks > 1:
        acc = lax.fori_loop(
            0, full_chunks,
            lambda c, a: a + chunk_contrib(c * chunk_rows, chunk_rows),
            acc, unroll=2)
    if rem:
        acc = acc + chunk_contrib(full_chunks * chunk_rows, rem)

    out_ref[0, 0] = out_ref[0, 0] + acc


@functools.partial(
    jax.jit,
    static_argnames=("max_block_bytes", "weight_resident_max_bytes", "chunk_rows"))
def weighted_bce_loss(pred, target, weight, *,
                      max_block_bytes=_MAX_BLOCK_BYTES,
                      weight_resident_max_bytes=_WEIGHT_RESIDENT_MAX_BYTES,
                      chunk_rows=_CHUNK_ROWS):
    """Equivalent of WeightedBCELoss(weight)(pred, target): scalar f32 'sum' loss."""
    B = pred.shape[0]
    sample_shape = pred.shape[1:]
    n = math.prod(sample_shape)

    itemsize = jnp.dtype(pred.dtype).itemsize
    sub = {4: 8, 2: 16, 1: 32}.get(itemsize, 8)      # sublane packing granularity
    chunk_rows = max(sub, (chunk_rows // sub) * sub)

    # ---- static tiling decisions -------------------------------------------
    rows = _cdiv(n, _LANES)
    rows_aligned = _round_up(rows, sub)              # row extent of the streamed view
    cap_rows = max(sub, (max_block_bytes // (_LANES * itemsize)) // sub * sub)
    num_row_blocks = _cdiv(rows_aligned, cap_rows)
    tile_rows = _round_up(_cdiv(rows_aligned, num_row_blocks), sub)   # balanced, near-full blocks
    num_row_blocks = _cdiv(rows_aligned, tile_rows)

    # v7x: 2-way split of the row-block axis when the batch axis alone cannot
    # give both TensorCores work.  No effect on v5e/v6e (single core).
    splits = 2 if (B % 2 == 1 and num_row_blocks >= 2) else 1
    tiles_per_split = _cdiv(num_row_blocks, splits)
    covered_rows = splits * tiles_per_split * tile_rows
    needs_mask = covered_rows > rows_aligned         # ragged/phantom blocks exist

    # ---- streamed input views (zero-copy in the aligned common case) --------
    elems_aligned = rows_aligned * _LANES
    p2 = pred.reshape(B, n)
    t2 = target.reshape(B, n)
    if elems_aligned != n:
        # TODO(synk): a manual-DMA (memory_space=pl.ANY) path could avoid this
        # full-array pad copy for sample sizes that are not a multiple of
        # sub*128; aligned sizes (the common case) take the zero-copy path.
        p2 = jnp.pad(p2, ((0, 0), (0, elems_aligned - n)))
        t2 = jnp.pad(t2, ((0, 0), (0, elems_aligned - n)))
    xs = p2.reshape(B, rows_aligned, _LANES)
    ys = t2.reshape(B, rows_aligned, _LANES)

    # Per-sample weight (broadcast over batch in the PyTorch module): pad the
    # small per-sample map once with zeros out to the full covered extent so
    # every block / dynamic slice stays in bounds; kept in its native dtype.
    w1 = jnp.broadcast_to(weight, sample_shape).reshape(n)
    w_elems = covered_rows * _LANES
    if w_elems != n:
        w1 = jnp.pad(w1, (0, w_elems - n))
    ws = w1.reshape(covered_rows, _LANES)
    w_itemsize = jnp.dtype(ws.dtype).itemsize
    weight_resident = covered_rows * _LANES * w_itemsize <= weight_resident_max_bytes

    # ---- BlockSpecs ----------------------------------------------------------
    nb_last = num_row_blocks - 1

    def row_block(s, t):
        # Clamp phantom blocks (only possible with the 2-way split) so the DMA
        # never targets a fully out-of-range window; their rows are masked.
        return jnp.minimum(s * tiles_per_split + t, nb_last)

    pred_spec = pl.BlockSpec((1, tile_rows, _LANES),
                             lambda b, s, t: (b, row_block(s, t), 0))
    tgt_spec = pl.BlockSpec((1, tile_rows, _LANES),
                            lambda b, s, t: (b, row_block(s, t), 0))
    if weight_resident:
        # Loaded once, stays resident for the whole grid (constant block index).
        w_spec = pl.BlockSpec((covered_rows, _LANES), lambda b, s, t: (0, 0))
    else:
        # TODO(synk): per-sample weights too large to keep resident are still
        # re-streamed once per batch index; a (tiles, batch) grid order with a
        # VMEM scratch accumulator would bring that back down to a single pass.
        w_spec = pl.BlockSpec((tile_rows, _LANES),
                              lambda b, s, t: (s * tiles_per_split + t, 0))
    out_spec = pl.BlockSpec((1, 1, _SUBLANES, _LANES), lambda b, s, t: (b, s, 0, 0))

    total = B * n
    cost = pl.CostEstimate(
        flops=7 * total,
        transcendentals=2 * total,
        bytes_accessed=2 * total * itemsize + w_elems * w_itemsize
        + B * splits * _SUBLANES * _LANES * 4,
    )

    partials = pl.pallas_call(
        functools.partial(
            _wbce_kernel,
            rows_valid=rows_aligned,
            tile_rows=tile_rows,
            chunk_rows=chunk_rows,
            tiles_per_split=tiles_per_split,
            weight_resident=weight_resident,
            needs_mask=needs_mask,
        ),
        out_shape=jax.ShapeDtypeStruct((B, splits, _SUBLANES, _LANES), jnp.float32),
        grid=(B, splits, tiles_per_split),
        in_specs=[pred_spec, tgt_spec, w_spec],
        out_specs=out_spec,
        compiler_params=pltpu.CompilerParams(
            dimension_semantics=("parallel", "parallel", "arbitrary"),
            vmem_limit_bytes=_VMEM_LIMIT_BYTES,
        ),
        cost_estimate=cost,
    )(xs, ys, ws)

    # One tiny cross-lane reduction over the (B, splits, 8, 128) partial slabs;
    # keep the accumulated sum in f32 (no downcast).
    return jnp.sum(partials)


def _reference(pred, target, weight):
    wf = jnp.broadcast_to(weight, pred.shape).astype(jnp.float32)
    x = pred.astype(jnp.float32)
    y = target.astype(jnp.float32)
    return jnp.sum(wf * (jnp.maximum(x, 0.0) - x * y + jnp.log1p(jnp.exp(-jnp.abs(x)))))


if __name__ == "__main__":
    key = jax.random.PRNGKey(0)
    k_pred, k_tgt, k_w = jax.random.split(key, 3)

    # ---- main check: module-consistent NCHW shapes (fast zero-copy path) ----
    B, C, H, W = 2, 4, 16, 16
    pred = jax.random.normal(k_pred, (B, C, H, W), dtype=jnp.float32)
    target = (jax.random.uniform(k_tgt, (B, C, H, W)) > 0.5).astype(jnp.float32)
    weight_mat = jax.random.uniform(k_w, (C, H, W), dtype=jnp.float32,
                                    minval=0.5, maxval=1.5)

    loss = weighted_bce_loss(pred, target, weight_mat)
    jax.block_until_ready(loss)
    ref = _reference(pred, target, weight_mat)
    assert jnp.allclose(loss, ref, rtol=1e-5, atol=1e-4), (loss, ref)

    # ---- extra small checks exercising the multi-block / masked / split /
    # strip-mined / streamed-weight paths (tiny tiles forced via static args) --
    k2p, k2t, k2w = jax.random.split(jax.random.PRNGKey(0), 3)
    B2, C2, H2, W2 = 3, 2, 32, 48          # odd batch, rows not a tile multiple
    pred2 = jax.random.normal(k2p, (B2, C2, H2, W2), dtype=jnp.float32)
    target2 = (jax.random.uniform(k2t, (B2, C2, H2, W2)) > 0.5).astype(jnp.float32)
    weight2 = jax.random.uniform(k2w, (C2, H2, W2), dtype=jnp.float32,
                                 minval=0.5, maxval=1.5)
    ref2 = _reference(pred2, target2, weight2)

    loss2 = weighted_bce_loss(pred2, target2, weight2,
                              max_block_bytes=8 * 1024, chunk_rows=8)
    jax.block_until_ready(loss2)
    assert jnp.allclose(loss2, ref2, rtol=1e-5, atol=1e-4), (loss2, ref2)

    loss3 = weighted_bce_loss(pred2, target2, weight2,
                              max_block_bytes=8 * 1024, chunk_rows=8,
                              weight_resident_max_bytes=0)   # streamed-weight path
    jax.block_until_ready(loss3)
    assert jnp.allclose(loss3, ref2, rtol=1e-5, atol=1e-4), (loss3, ref2)

    print("KERNEL_OK")
</pallas_src>

<mosaic_0001>
module attributes {stable_mosaic.version = 11 : i64} {
  func.func @_wbce_kernel(%arg0: i32, %arg1: i32, %arg2: i32, %arg3: memref<1x8x128xf32, #tpu.memory_space<vmem>>, %arg4: memref<1x8x128xf32, #tpu.memory_space<vmem>>, %arg5: memref<8x128xf32, #tpu.memory_space<vmem>>, %arg6: memref<1x1x8x128xf32, #tpu.memory_space<vmem>>) attributes {dimension_semantics = [#tpu.dimension_semantics<parallel>, #tpu.dimension_semantics<parallel>, #tpu.dimension_semantics<arbitrary>], iteration_bounds = array<i64: 2, 1, 1>, scalar_prefetch = 0 : i64, scratch_operands = 0 : i64, tpu.core_type = #tpu.core_type<tc>, window_params = [{transform_indices = @transform_0, window_bounds = array<i64: 1, 8, 128>}, {transform_indices = @transform_1, window_bounds = array<i64: 1, 8, 128>}, {pipeline_mode = #tpu.pipeline_mode<synchronous>, transform_indices = @transform_2, window_bounds = array<i64: 8, 128>}, {transform_indices = @transform_3, window_bounds = array<i64: 1, 1, 8, 128>}]} {
    %c0_i32 = arith.constant 0 : i32
    %0 = arith.cmpi eq, %arg2, %c0_i32 : i32
    %1 = arith.extui %0 : i1 to i32
    %c0_i32_0 = arith.constant 0 : i32
    %2 = arith.cmpi ne, %1, %c0_i32_0 : i32
    scf.if %2 {
      %cst_19 = arith.constant 0.000000e+00 : f32
      %35 = vector.broadcast %cst_19 : f32 to vector<1x1x8x128xf32>
      %c0_20 = arith.constant 0 : index
      %c0_21 = arith.constant 0 : index
      %c0_22 = arith.constant 0 : index
      %c0_23 = arith.constant 0 : index
      %36 = vector.load %arg6[%c0_20, %c0_21, %c0_22, %c0_23] : memref<1x1x8x128xf32, #tpu.memory_space<vmem>>, vector<1x1x8x128xf32>
      tpu.vector_store %arg6[%c0_20, %c0_21, %c0_22, %c0_23], %35 {strides = array<i32>} : memref<1x1x8x128xf32, #tpu.memory_space<vmem>>, vector<1x1x8x128xf32>,
    } else {
    }
    %c1_i32 = arith.constant 1 : i32
    %3 = arith.muli %arg1, %c1_i32 : i32
    %4 = arith.addi %3, %arg2 : i32
    %c8_i32 = arith.constant 8 : i32
    %5 = arith.muli %4, %c8_i32 : i32
    %cst = arith.constant 0.000000e+00 : f32
    %6 = vector.broadcast %cst : f32 to vector<8x128xf32>
    %c0 = arith.constant 0 : index
    %c0_1 = arith.constant 0 : index
    %c0_2 = arith.constant 0 : index
    %7 = vector.load %arg3[%c0, %c0_1, %c0_2] : memref<1x8x128xf32, #tpu.memory_space<vmem>>, vector<1x8x128xf32>
    %8 = vector.shape_cast %7 : vector<1x8x128xf32> to vector<8x128xf32>
    %c0_3 = arith.constant 0 : index
    %c0_4 = arith.constant 0 : index
    %c0_5 = arith.constant 0 : index
    %9 = vector.load %arg4[%c0_3, %c0_4, %c0_5] : memref<1x8x128xf32, #tpu.memory_space<vmem>>, vector<1x8x128xf32>
    %10 = vector.shape_cast %9 : vector<1x8x128xf32> to vector<8x128xf32>
    %c0_i32_6 = arith.constant 0 : i32
    %11 = arith.addi %5, %c0_i32_6 : i32
    %12 = tpu.assume_multiple %11, 8 : i32
    %13 = arith.index_cast %12 : i32 to index
    %c0_7 = arith.constant 0 : index
    %14 = vector.load %arg5[%13, %c0_7] : memref<8x128xf32, #tpu.memory_space<vmem>>, vector<8x128xf32>
    %cst_8 = arith.constant 0.000000e+00 : f32
    %15 = vector.broadcast %cst_8 : f32 to vector<8x128xf32>
    %16 = arith.maximumf %8, %15 : vector<8x128xf32>
    %17 = arith.mulf %8, %10 : vector<8x128xf32>
    %18 = arith.subf %16, %17 : vector<8x128xf32>
    %19 = math.absf %8 : vector<8x128xf32>
    %cst_9 = arith.constant 0.000000e+00 : f32
    %20 = vector.broadcast %cst_9 : f32 to vector<8x128xf32>
    %21 = arith.subf %20, %19 : vector<8x128xf32>
    %22 = math.exp %21 : vector<8x128xf32>
    %23 = math.log1p %22 : vector<8x128xf32>
    %24 = arith.addf %18, %23 : vector<8x128xf32>
    %25 = arith.mulf %14, %24 : vector<8x128xf32>
    %26 = vector.shape_cast %25 : vector<8x128xf32> to vector<1x8x128xf32>
    %cst_10 = arith.constant dense<0.000000e+00> : vector<8x128xf32>
    %27 = vector.multi_reduction <add>, %26, %cst_10 [0] : vector<1x8x128xf32> to vector<8x128xf32>
    %28 = arith.addf %6, %27 : vector<8x128xf32>
    %c0_11 = arith.constant 0 : index
    %c0_12 = arith.constant 0 : index
    %c0_13 = arith.constant 0 : index
    %c0_14 = arith.constant 0 : index
    %29 = vector.load %arg6[%c0_11, %c0_12, %c0_13, %c0_14] : memref<1x1x8x128xf32, #tpu.memory_space<vmem>>, vector<1x1x8x128xf32>
    %30 = vector.shape_cast %29 : vector<1x1x8x128xf32> to vector<8x128xf32>
    %31 = arith.addf %30, %28 : vector<8x128xf32>
    %c0_15 = arith.constant 0 : index
    %c0_16 = arith.constant 0 : index
    %c0_17 = arith.constant 0 : index
    %c0_18 = arith.constant 0 : index
    %32 = vector.load %arg6[%c0_15, %c0_16, %c0_17, %c0_18] : memref<1x1x8x128xf32, #tpu.memory_space<vmem>>, vector<1x1x8x128xf32>
    %33 = vector.shape_cast %32 : vector<1x1x8x128xf32> to vector<8x128xf32>
    %34 = vector.shape_cast %31 : vector<8x128xf32> to vector<1x1x8x128xf32>
    tpu.vector_store %arg6[%c0_15, %c0_16, %c0_17, %c0_18], %34 {strides = array<i32>} : memref<1x1x8x128xf32, #tpu.memory_space<vmem>>, vector<1x1x8x128xf32>,
    return
  }
  func.func @transform_0(%arg0: i32, %arg1: i32, %arg2: i32) -> (i32, i32, i32) {
    %c1_i32 = arith.constant 1 : i32
    %0 = arith.muli %arg1, %c1_i32 : i32
    %1 = arith.addi %0, %arg2 : i32
    %c0_i32 = arith.constant 0 : i32
    %2 = arith.minsi %1, %c0_i32 : i32
    %c0_i32_0 = arith.constant 0 : i32
    %c0_i32_1 = arith.constant 0 : i32
    return %arg0, %2, %c0_i32_0 : i32, i32, i32
  }
  func.func @transform_1(%arg0: i32, %arg1: i32, %arg2: i32) -> (i32, i32, i32) {
    %c1_i32 = arith.constant 1 : i32
    %0 = arith.muli %arg1, %c1_i32 : i32
    %1 = arith.addi %0, %arg2 : i32
    %c0_i32 = arith.constant 0 : i32
    %2 = arith.minsi %1, %c0_i32 : i32
    %c0_i32_0 = arith.constant 0 : i32
    %c0_i32_1 = arith.constant 0 : i32
    return %arg0, %2, %c0_i32_0 : i32, i32, i32
  }
  func.func @transform_2(%arg0: i32, %arg1: i32, %arg2: i32) -> (i32, i32) {
    %c0_i32 = arith.constant 0 : i32
    %c0_i32_0 = arith.constant 0 : i32
    %c0_i32_1 = arith.constant 0 : i32
    return %c0_i32, %c0_i32_0 : i32, i32
  }
  func.func @transform_3(%arg0: i32, %arg1: i32, %arg2: i32) -> (i32, i32, i32, i32) {
    %c0_i32 = arith.constant 0 : i32
    %c0_i32_0 = arith.constant 0 : i32
    %c0_i32_1 = arith.constant 0 : i32
    return %arg0, %arg1, %c0_i32, %c0_i32_0 : i32, i32, i32, i32
  }
}

</mosaic_0001>

<llo_original>
// kernel: weighted_bce_loss.1
$region0: #{weighted_bce_loss.1}
  #allocation0 [shape = 'u32[]', space=smem, size = 0x4, offset = 0x4, fixed_abs, tag = 'smem constant byte address 0x4 - core index']
  #allocation1 [shape = 'u32[72,128]{1,0:T(1,128)}', space=vmem, size = 0x9000, scoped, tag = 'internal scratch']
  %s0 = inlined_call_operand.vmem [shape: f32[2,8,128], index: 0, kind: input, shape index: {}]
  %s1 = inlined_call_operand.vmem [shape: f32[2,8,128], index: 1, kind: input, shape index: {}]
  %s2 = inlined_call_operand.vmem [shape: f32[8,128], index: 2, kind: input, shape index: {}]
  %s3 = inlined_call_operand.vmem [shape: f32[2,1,8,128], index: 3, kind: output, shape index: {}]
  %s4 = sld [smem:[#allocation0]]
  $region49: #{weighted_bce_loss.1} parent=0
    _
  %s6 = ssub.s32 1, %s4
  %s7 = scalar_select 0, %s6, %s4
  loop: start=0, step=1, limit=4
  $region2: #{weighted_bce_loss.1} parent=0 // loop_pre_header
    _
  $region3: #{weighted_bce_loss.1} parent=0 // loop_header
    %s9 = sphi 0, %s13
    %p10 = scmp.ge.s32.totalorder %s9, 4
    %s16 = sphi 0, %s35
    %s17 = sphi 0, %s31
    %s18 = sphi 0, %s27
    %s19 = sphi 0, %s16
    %s20 = sphi 0, %s17
    %s21 = sphi 0, %s18
    %s22 = sphi 0, %s19
    %s23 = sphi 0, %s20
    %s24 = sphi 0, %s21
    %s46 = sphi 0, %s48
    %s49 = sphi 0, %s46
    %s50 = sphi 0, %s49
    %s66 = sphi 0, %s50
    %s80 = sphi 0, %s82
    %s83 = sphi 0, %s80
    %s84 = sphi 0, %s83
    %s100 = sphi 0, %s84
    %s104 = sphi 0, %s104
    %s106 = sphi 0, %s104
    %s107 = sphi 0, %s106
    %s121 = sphi 0, %s107
    %s129 = sphi 0, %s131
    %s132 = sphi 0, %s129
    %s133 = sphi 0, %s132
    %s149 = sphi 0, %s133
  $region4: #{weighted_bce_loss.1} parent=0 // loop_header_branch
    %12 = sbr.rel (%p10) target = $region8
  $region5: #{weighted_bce_loss.1} parent=0 // loop_body
    %s14 = ssub.s32 %s9, 1
    %s15 = ssub.s32 %s9, 2
    %s25 = sadd.s32 1, %s18
    %p26 = scmp.ge.s32.totalorder %s25, 1
    %s27 = scalar_select %p26, 0, %s25
    %s28 = sadd.s32 1, %s17
    %s29 = scalar_select %p26, %s28, %s17
    %p30 = scmp.ge.s32.totalorder %s29, 1
    %s31 = scalar_select %p30, 0, %s29
    %s32 = sadd.s32 1, %s16
    %s33 = scalar_select %p30, %s32, %s16
    %p34 = scmp.ge.s32.totalorder %s33, 2
    %s35 = scalar_select %p34, 0, %s33
    %s36 = sadd.s32 %s17, %s18
    %p37 = scmp.lt.s32.totalorder %s36, 0
    %s38 = scalar_select %p37, %s36, 0
    %s39 = sadd.s32 %s31, %s27
    %p40 = scmp.lt.s32.totalorder %s39, 0
    %s41 = scalar_select %p40, %s39, 0
    %s42 = ssub.s32 %s16, %s35
    %s43 = ssub.s32 %s38, %s41
    %s44 = sor.u32 %s42, %s43
    %p45 = scmp.eq.s32.totalorder %s44, 0
    %s47 = sadd.s32 %s46, 1
    %s48 = scalar_select %p45, %s46, %s47
    %p51 = pneg %p45
    %p52 = scmp.eq.s32.totalorder %s9, 1
    %p53 = por %p51, %p52
    %p54 = scmp.ne.s32.totalorder %s46, %s49
    %p55 = scmp.eq.s32.totalorder %s9, 0
    %p56 = por %p54, %p55
    %p57 = scmp.ne.s32.totalorder %s46, %s49
    %p58 = scmp.eq.s32.totalorder %s14, 1
    %p59 = por %p57, %p58
    %p60 = scmp.ne.s32.totalorder %s49, %s50
    %p61 = scmp.eq.s32.totalorder %s14, 0
    %p62 = por %p60, %p61
    %p63 = scmp.ne.s32.totalorder %s49, %s50
    %p64 = scmp.eq.s32.totalorder %s15, 1
    %p65 = por %p63, %p64
    %p67 = scmp.ne.s32.totalorder %s50, %s66
    %p68 = scmp.eq.s32.totalorder %s15, 0
    %p69 = por %p67, %p68
    %s70 = sadd.s32 %s17, %s18
    %p71 = scmp.lt.s32.totalorder %s70, 0
    %s72 = scalar_select %p71, %s70, 0
    %s73 = sadd.s32 %s31, %s27
    %p74 = scmp.lt.s32.totalorder %s73, 0
    %s75 = scalar_select %p74, %s73, 0
    %s76 = ssub.s32 %s16, %s35
    %s77 = ssub.s32 %s72, %s75
    %s78 = sor.u32 %s76, %s77
    %p79 = scmp.eq.s32.totalorder %s78, 0
    %s81 = sadd.s32 %s80, 1
    %s82 = scalar_select %p79, %s80, %s81
    %p85 = pneg %p79
    %p86 = scmp.eq.s32.totalorder %s9, 1
    %p87 = por %p85, %p86
    %p88 = scmp.ne.s32.totalorder %s80, %s83
    %p89 = scmp.eq.s32.totalorder %s9, 0
    %p90 = por %p88, %p89
    %p91 = scmp.ne.s32.totalorder %s80, %s83
    %p92 = scmp.eq.s32.totalorder %s14, 1
    %p93 = por %p91, %p92
    %p94 = scmp.ne.s32.totalorder %s83, %s84
    %p95 = scmp.eq.s32.totalorder %s14, 0
    %p96 = por %p94, %p95
    %p97 = scmp.ne.s32.totalorder %s83, %s84
    %p98 = scmp.eq.s32.totalorder %s15, 1
    %p99 = por %p97, %p98
    %p101 = scmp.ne.s32.totalorder %s84, %s100
    %p102 = scmp.eq.s32.totalorder %s15, 0
    %p103 = por %p101, %p102
    %s105 = sadd.s32 %s104, 1
    %p108 = scmp.eq.s32.totalorder %s9, 1
    %p109 = scmp.ne.s32.totalorder %s104, %s106
    %p110 = scmp.eq.s32.totalorder %s9, 0
    %p111 = por %p109, %p110
    %p112 = scmp.ne.s32.totalorder %s104, %s106
    %p113 = scmp.eq.s32.totalorder %s14, 1
    %p114 = por %p112, %p113
    %p115 = scmp.ne.s32.totalorder %s106, %s107
    %p116 = scmp.eq.s32.totalorder %s14, 0
    %p117 = por %p115, %p116
    %p118 = scmp.ne.s32.totalorder %s106, %s107
    %p119 = scmp.eq.s32.totalorder %s15, 1
    %p120 = por %p118, %p119
    %p122 = scmp.ne.s32.totalorder %s107, %s121
    %p123 = scmp.eq.s32.totalorder %s15, 0
    %p124 = por %p122, %p123
    %s125 = ssub.s32 %s16, %s35
    %s126 = ssub.s32 %s17, %s31
    %s127 = sor.u32 %s125, %s126
    %p128 = scmp.eq.s32.totalorder %s127, 0
    %s130 = sadd.s32 %s129, 1
    %s131 = scalar_select %p128, %s129, %s130
    %p134 = pneg %p128
    %p135 = scmp.eq.s32.totalorder %s9, 1
    %p136 = por %p134, %p135
    %p137 = scmp.ne.s32.totalorder %s129, %s132
    %p138 = scmp.eq.s32.totalorder %s9, 0
    %p139 = por %p137, %p138
    %p140 = scmp.ne.s32.totalorder %s129, %s132
    %p141 = scmp.eq.s32.totalorder %s14, 1
    %p142 = por %p140, %p141
    %p143 = scmp.ne.s32.totalorder %s132, %s133
    %p144 = scmp.eq.s32.totalorder %s14, 0
    %p145 = por %p143, %p144
    %p146 = scmp.ne.s32.totalorder %s132, %s133
    %p147 = scmp.eq.s32.totalorder %s15, 1
    %p148 = por %p146, %p147
    %p150 = scmp.ne.s32.totalorder %s133, %s149
    %p151 = scmp.eq.s32.totalorder %s15, 0
    %p152 = por %p150, %p151
    %p153 = scmp.le.s32.totalorder 1, %s9
    %p154 = scmp.lt.s32.totalorder %s9, 3
    %p155 = pnand %p153, %p154
    %p156 = pneg %p155
    // Predicated region
    $region9: #{weighted_bce_loss.1} parent=5 // pred_check
      _
    $region10: #{weighted_bce_loss.1} parent=5 // pred_check_branch
      %158 = sbr.rel (%p155) target = $region12
    $region11: #{weighted_bce_loss.1} parent=5 // pred_region
      %s159 = ssub.s32 %s9, 1
      // Predicated region
      $region13: #{weighted_bce_loss.1} parent=11 // pred_check
        %p160 = pneg %p117
      $region14: #{weighted_bce_loss.1} parent=11 // pred_check_branch
        %162 = sbr.rel (%p160) target = $region16
      $region15: #{weighted_bce_loss.1} parent=11 // pred_region
        _
      $region16: #{weighted_bce_loss.1} parent=11 // pred_fallthru
        _
    $region12: #{weighted_bce_loss.1} parent=5 // pred_fallthru
      _
    %p163 = scmp.lt.s32.totalorder %s9, 2
    // Predicated region
    $region17: #{weighted_bce_loss.1} parent=5 // pred_check
      %p164 = pneg %p163
    $region18: #{weighted_bce_loss.1} parent=5 // pred_check_branch
      %166 = sbr.rel (%p164) target = $region20
    $region19: #{weighted_bce_loss.1} parent=5 // pred_region
      // Predicated region
      $region21: #{weighted_bce_loss.1} parent=19 // pred_check
        %p167 = pneg %p56
      $region22: #{weighted_bce_loss.1} parent=19 // pred_check_branch
        %169 = sbr.rel (%p167) target = $region24
      $region23: #{weighted_bce_loss.1} parent=19 // pred_region
        %s170 = sadd.s32 %s17, %s18
        %p171 = scmp.lt.s32.totalorder %s170, 0
        %s172 = scalar_select %p171, %s170, 0
        %p173 = scmp.lt.s32.totalorder %s16, 1
        %s174 = scalar_select %p173, %s16, 1
        %p175 = scmp.lt.s32.totalorder %s172, 0
        %s176 = scalar_select %p175, %s172, 0
        %s177 = sadd.s32 %s176, %s174
        %s178 = smul.addr %s177, 8
        %s179 = scalar_lea.vmem %s0, %s178
        %s180 = sadd.s32 %s17, %s18
        %p181 = scmp.lt.s32.totalorder %s180, 0
        %s182 = scalar_select %p181, %s180, 0
      $region24: #{weighted_bce_loss.1} parent=19 // pred_fallthru
        _
      // Predicated region
      $region25: #{weighted_bce_loss.1} parent=19 // pred_check
        %p183 = pneg %p90
      $region26: #{weighted_bce_loss.1} parent=19 // pred_check_branch
        %185 = sbr.rel (%p183) target = $region28
      $region27: #{weighted_bce_loss.1} parent=19 // pred_region
        %s186 = sadd.s32 %s17, %s18
        %p187 = scmp.lt.s32.totalorder %s186, 0
        %s188 = scalar_select %p187, %s186, 0
        %p189 = scmp.lt.s32.totalorder %s16, 1
        %s190 = scalar_select %p189, %s16, 1
        %p191 = scmp.lt.s32.totalorder %s188, 0
        %s192 = scalar_select %p191, %s188, 0
        %s193 = sadd.s32 %s192, %s190
        %s194 = smul.addr %s193, 8
        %s195 = scalar_lea.vmem %s1, %s194
        %s196 = sadd.s32 %s17, %s18
        %p197 = scmp.lt.s32.totalorder %s196, 0
        %s198 = scalar_select %p197, %s196, 0
      $region28: #{weighted_bce_loss.1} parent=19 // pred_fallthru
        _
    $region20: #{weighted_bce_loss.1} parent=5 // pred_fallthru
      _
    %p199 = scmp.le.s32.totalorder 1, %s9
    %p200 = scmp.lt.s32.totalorder %s9, 3
    %p201 = pnand %p199, %p200
    %p202 = pneg %p201
    // Predicated region
    $region29: #{weighted_bce_loss.1} parent=5 // pred_check
      _
    $region30: #{weighted_bce_loss.1} parent=5 // pred_check_branch
      %204 = sbr.rel (%p201) target = $region32
    $region31: #{weighted_bce_loss.1} parent=5 // pred_region
      %s205 = ssub.s32 %s9, 1
      %s206 = sadd.s32 %s20, %s21
      %p207 = scmp.lt.s32.totalorder %s206, 0
      %s208 = scalar_select %p207, %s206, 0
      %p209 = scmp.lt.s32.totalorder %s19, 1
      %s210 = scalar_select %p209, %s19, 1
      %p211 = scmp.lt.s32.totalorder %s208, 0
      %s212 = scalar_select %p211, %s208, 0
      %s213 = sadd.s32 %s212, %s210
      %s214 = smul.addr %s213, 8
      %s215 = scalar_lea.vmem %s0, %s214
      %p216 = pneg %p62
      %p217 = pneg %p59
      %s218 = sadd.s32 %s20, %s21
      %p219 = scmp.lt.s32.totalorder %s218, 0
      %s220 = scalar_select %p219, %s218, 0
      %p221 = scmp.lt.s32.totalorder %s19, 1
      %s222 = scalar_select %p221, %s19, 1
      %p223 = scmp.lt.s32.totalorder %s220, 0
      %s224 = scalar_select %p223, %s220, 0
      %s225 = sadd.s32 %s224, %s222
      %s226 = smul.addr %s225, 8
      %s227 = scalar_lea.vmem %s1, %s226
      %p228 = pneg %p96
      %p229 = pneg %p93
      %p230 = pneg %p117
      %p231 = pneg %p114
      %p232 = pneg %p145
      %p233 = pneg %p142
      %p234 = scmp.lt.s32.totalorder %s19, 1
      %s235 = scalar_select %p234, %s19, 1
      %p236 = scmp.lt.s32.totalorder %s20, 0
      %s237 = scalar_select %p236, %s20, 0
      %s238 = sadd.s32 %s237, %s235
      %s239 = smul.addr %s238, 8
      %s240 = scalar_lea.vmem %s3, %s239
      %s241 = sadd.s32 %s20, %s21
      %p242 = scmp.lt.s32.totalorder %s241, 0
      %s243 = scalar_select %p242, %s241, 0
      %p244 = scmp.lt.s32.totalorder %s19, 1
      %s245 = scalar_select %p244, %s19, 1
      %p246 = scmp.lt.s32.totalorder %s243, 0
      %s247 = scalar_select %p246, %s243, 0
      %s248 = sadd.s32 %s247, %s245
      %s249 = smul.addr %s248, 8
      %s250 = scalar_lea.vmem %s0, %s249
      %s251 = sadd.s32 %s20, %s21
      %p252 = scmp.lt.s32.totalorder %s251, 0
      %s253 = scalar_select %p252, %s251, 0
      %s254 = sadd.s32 %s20, %s21
      %p255 = scmp.lt.s32.totalorder %s254, 0
      %s256 = scalar_select %p255, %s254, 0
      %p257 = scmp.lt.s32.totalorder %s19, 1
      %s258 = scalar_select %p257, %s19, 1
      %p259 = scmp.lt.s32.totalorder %s256, 0
      %s260 = scalar_select %p259, %s256, 0
      %s261 = sadd.s32 %s260, %s258
      %s262 = smul.addr %s261, 8
      %s263 = scalar_lea.vmem %s1, %s262
      %s264 = sadd.s32 %s20, %s21
      %p265 = scmp.lt.s32.totalorder %s264, 0
      %s266 = scalar_select %p265, %s264, 0
      %p267 = scmp.lt.s32.totalorder %s19, 1
      %s268 = scalar_select %p267, %s19, 1
      %p269 = scmp.lt.s32.totalorder %s20, 0
      %s270 = scalar_select %p269, %s20, 0
      %s271 = sadd.s32 %s270, %s268
      %s272 = smul.addr %s271, 8
      %s273 = scalar_lea.vmem %s3, %s272
      %p274 = scmp.eq.s32.totalorder %s21, 0
      // Predicated region
      $region33: #{weighted_bce_loss.1} parent=31 // pred_check
        %p275 = pneg %p274
      $region34: #{weighted_bce_loss.1} parent=31 // pred_check_branch
        %277 = sbr.rel (%p275) target = $region36
      $region35: #{weighted_bce_loss.1} parent=31 // pred_region
        %278 = vst [vmem:[%s273] sm:$0xff] 0.0
      $region36: #{weighted_bce_loss.1} parent=31 // pred_fallthru
        _
      %s279 = sadd.s32 %s20, %s21
      %s280 = smul.u32 %s279, 8
      %v281 = vld [vmem:[%s250] sm:$0xff]
      %v282 = vld [vmem:[%s263] sm:$0xff]
      %s283 = scalar_lea.vmem %s2, %s280
      %v284 = vld [vmem:[%s283] sm:$0xff]
      %v285 = vmax.f32 %v281, 0.0
      %v286 = vmul.f32 %v281, %v282
      %v287 = vsub.f32 %v285, %v286
      %v288 = vand.u32 2147483647, %v281
      %v289 = vsub.f32 0.0, %v288
      %v290 = vmul.f32 %v289, 1.442695
      %v291 = vpow.pop %v290
      %v292 = vadd.f32 %v291, 1.0
      %v293 = vlog2.pop %v292
      %v294 = vmul.f32 %v293, 0.6931472
      %v295 = vmul.f32 -0.5, %v291
      %v296 = vadd.f32 %v295, 1.0
      %v297 = vmul.f32 %v296, %v291
      %v298 = vand.u32 2147483647, %v291
      %vm299 = vcmp.lt.f32.partialorder %v298, 0.0004427343
      %v300 = vsel %vm299, %v297, %v294
      %v301 = vadd.f32 %v287, %v300
      %v302 = vmul.f32 %v284, %v301
      %v303 = vadd.f32 %v302, 0.0
      %v304 = vadd.f32 %v303, 0.0
      %v305 = vld [vmem:[%s273] sm:$0xff]
      %v306 = vadd.f32 %v305, %v304
      %307 = vst [vmem:[%s273] sm:$0xff] %v306
      %p308 = scmp.lt.s32.totalorder %s19, 1
      %s309 = scalar_select %p308, %s19, 1
      %p310 = scmp.lt.s32.totalorder %s20, 0
      %s311 = scalar_select %p310, %s20, 0
      %s312 = sadd.s32 %s311, %s309
      %s313 = smul.addr %s312, 8
      %s314 = scalar_lea.vmem %s3, %s313
      // Predicated region
      $region37: #{weighted_bce_loss.1} parent=31 // pred_check
        %p315 = pneg %p142
      $region38: #{weighted_bce_loss.1} parent=31 // pred_check_branch
        %317 = sbr.rel (%p315) target = $region40
      $region39: #{weighted_bce_loss.1} parent=31 // pred_region
        _
      $region40: #{weighted_bce_loss.1} parent=31 // pred_fallthru
        _
    $region32: #{weighted_bce_loss.1} parent=5 // pred_fallthru
      _
    %p318 = scmp.le.s32.totalorder 2, %s9
    // Predicated region
    $region41: #{weighted_bce_loss.1} parent=5 // pred_check
      %p319 = pneg %p318
    $region42: #{weighted_bce_loss.1} parent=5 // pred_check_branch
      %321 = sbr.rel (%p319) target = $region44
    $region43: #{weighted_bce_loss.1} parent=5 // pred_region
      %s322 = ssub.s32 %s9, 2
      // Predicated region
      $region45: #{weighted_bce_loss.1} parent=43 // pred_check
        %p323 = pneg %p148
      $region46: #{weighted_bce_loss.1} parent=43 // pred_check_branch
        %325 = sbr.rel (%p323) target = $region48
      $region47: #{weighted_bce_loss.1} parent=43 // pred_region
        %p326 = scmp.lt.s32.totalorder %s22, 1
        %s327 = scalar_select %p326, %s22, 1
        %p328 = scmp.lt.s32.totalorder %s23, 0
        %s329 = scalar_select %p328, %s23, 0
        %s330 = sadd.s32 %s329, %s327
        %s331 = smul.addr %s330, 8
        %s332 = scalar_lea.vmem %s3, %s331
      $region48: #{weighted_bce_loss.1} parent=43 // pred_fallthru
        _
    $region44: #{weighted_bce_loss.1} parent=5 // pred_fallthru
      _
  $region6: #{weighted_bce_loss.1} parent=0 // loop_footer
    %s13 = sadd.s32 1, %s9
  $region7: #{weighted_bce_loss.1} parent=0 // loop_footer_branch
    %8 = sbr.rel target = $region3
  $region8: #{weighted_bce_loss.1} parent=0 // loop_exit
    _

</llo_original>
